<compile_context>
chip_gen: v6e
topology: v6e:2x2x1
jax: 0.10.0
libtpu: 0.0.40
codegen_flags: <defaults>
</compile_context>

<pallas_src>
import math

import jax
import jax.numpy as jnp
from jax.experimental import pallas as pl
from jax.experimental.pallas import tpu as pltpu

# Synthetic stand-in for openbustools.traveltime.models.deeptte.embedding.EMBED_DICT
EMBED_DICT = {
    "timeID": {"vocab_dim": 1440, "embed_dim": 8},
    "weekID": {"vocab_dim": 7, "embed_dim": 4},
}

_K_CHUNK = 256  # contraction chunk (multiple of 128; MXU-friendly on v6e/v7x)


def _round_up(x, m):
    return (x + m - 1) // m * m


def _layout():
    """Explicit row/column offsets of each embedding table in the fused table."""
    items = []
    row = col = 0
    for name, cfg in EMBED_DICT.items():
        items.append((name, row, col, cfg["vocab_dim"], cfg["embed_dim"]))
        row += cfg["vocab_dim"]
        col += cfg["embed_dim"]
    return items, row, col


def out_size():
    _, _, cols = _layout()
    return cols + 1


_ITEMS, _TOTAL_VOCAB, _EMBED_COLS = _layout()
_DIST_COL = _EMBED_COLS                      # output column holding cumul_dist_m
_OUT_W = _EMBED_COLS + 1                     # true output width (13)
_K_PAD = _round_up(_TOTAL_VOCAB, _K_CHUNK)   # padded contraction dim (1536)
_N_ATTR = len(_ITEMS)

# The cumul_dist_m column is overwritten after the matmul; the fused table must
# therefore be all-zero in that column.  Guaranteed structurally: no embedding
# occupies column _DIST_COL.
assert all(c0 + dim <= _DIST_COL for _, _, c0, _, dim in _ITEMS), (
    "EMBED_DICT layout collides with the cumul_dist_m output column")


def build_fused_table(params):
    """Stack all embedding tables into one block-diagonal (K_PAD, OUT_W) table.

    Build this ONCE at init (it only depends on the weights) and reuse it for
    every forward call -- rebuilding it per call is pure wrapper overhead.
    """
    rows = []
    for name, r0, c0, vocab, dim in _ITEMS:
        w = params[name + "_em"].astype(jnp.float32)
        rows.append(jnp.pad(w, ((0, 0), (c0, _OUT_W - c0 - dim))))
    table = jnp.concatenate(rows, axis=0)                 # (_TOTAL_VOCAB, OUT_W)
    return jnp.pad(table, ((0, _K_PAD - table.shape[0]), (0, 0)))


def _attr_kernel(ids_ref, dist_ref, table_ref, out_ref):
    """Fused embedding gather + concat for one batch tile.

    ids_ref:   (TILE_B, n_attr) int32 raw attribute ids (row offsets are folded
               in as compile-time constants below).
    dist_ref:  (TILE_B, 1) float32 cumul_dist_m.
    table_ref: (K_PAD, OUT_W) float32 fused block-diagonal table (VMEM-resident).
    out_ref:   (TILE_B, OUT_W) float32 output block.

    NOTE: out-of-range / negative ids match no row and yield a zero embedding
    row (nn.Embedding would be undefined/error for such inputs).  Padded batch
    rows (ids = 0) produce valid-looking row-0 embeddings that the wrapper
    slices off.
    """
    tile_b = ids_ref.shape[0]
    # Chunk-local iota is identical for every chunk: build it once.
    iota = jax.lax.broadcasted_iota(jnp.int32, (tile_b, _K_CHUNK), 1)
    acc = jnp.zeros((tile_b, _OUT_W), dtype=jnp.float32)

    for c0 in range(0, _K_PAD, _K_CHUNK):
        # Only compare attributes whose row range intersects this chunk
        # (weekID only touches the final chunk -> ~5/6 fewer compares for it).
        active = [(j, r0) for j, (_, r0, _, vocab, _) in enumerate(_ITEMS)
                  if r0 < c0 + _K_CHUNK and r0 + vocab > c0]
        if not active:
            continue
        hit = None
        for j, r0 in active:
            m = iota == (ids_ref[:, j:j + 1] + (r0 - c0))
            hit = m if hit is None else jnp.logical_or(hit, m)
        # Single OR'd mask -> single bool->f32 cast (one multi-hot build pass).
        hot = hit.astype(jnp.float32)
        acc = acc + jnp.dot(hot, table_ref[c0:c0 + _K_CHUNK, :],
                            preferred_element_type=jnp.float32)

    out_ref[...] = acc
    # cumul_dist_m column (1-wide store; fused table is zero in this column).
    out_ref[:, _DIST_COL:_DIST_COL + 1] = dist_ref[...]


def attr_net_forward(attr, fused_table, *, tile_b=512):
    """Forward pass matching Attr.Net.forward.

    attr: dict with 'timeID' (B,) int, 'weekID' (B,) int, 'cumul_dist_m' (B,) float.
    fused_table: prebuilt (K_PAD, OUT_W) f32 table from build_fused_table(params).
    tile_b: batch tile size (rounded to a multiple of 8; 512/1024 recommended
            for production batches -- chunked-K keeps VMEM independent of it).
    """
    B = attr["timeID"].shape[0]

    ids = jnp.stack([attr[name].reshape(-1).astype(jnp.int32)
                     for name, *_ in _ITEMS], axis=1)        # (B, n_attr) int32
    dist = attr["cumul_dist_m"].reshape(-1, 1).astype(jnp.float32)

    # Batch tiling: multiple of 8 sublanes; prefer >= 2 tiles so the
    # ("parallel",) grid can use both TensorCores on v7x.
    tile_b = max(8, _round_up(min(tile_b, _round_up(B, 8)), 8))
    n_tiles = math.ceil(B / tile_b)
    if n_tiles == 1 and B >= 16:
        tile_b = max(8, _round_up(math.ceil(B / 2), 8))
        n_tiles = math.ceil(B / tile_b)
    b_pad = n_tiles * tile_b
    if b_pad != B:
        ids = jnp.pad(ids, ((0, b_pad - B), (0, 0)))
        dist = jnp.pad(dist, ((0, b_pad - B), (0, 0)))

    out = pl.pallas_call(
        _attr_kernel,
        out_shape=jax.ShapeDtypeStruct((b_pad, _OUT_W), jnp.float32),
        grid_spec=pltpu.PrefetchScalarGridSpec(
            num_scalar_prefetch=0,
            grid=(n_tiles,),
            in_specs=[
                pl.BlockSpec((tile_b, _N_ATTR), lambda i: (i, 0)),
                pl.BlockSpec((tile_b, 1), lambda i: (i, 0)),
                # Fused table: whole-array, VMEM-resident, single-buffered
                # (no per-step re-DMA, no second pipeline buffer).
                pl.BlockSpec(memory_space=pltpu.MemorySpace.VMEM),
            ],
            out_specs=pl.BlockSpec((tile_b, _OUT_W), lambda i: (i, 0)),
        ),
        compiler_params=pltpu.CompilerParams(
            dimension_semantics=("parallel",),
        ),
    )(ids, dist, fused_table)

    return out if b_pad == B else out[:B]


def init_params(key):
    """Deterministic embedding tables (same shapes as nn.Embedding weights)."""
    params = {}
    for name, cfg in EMBED_DICT.items():
        key, sub = jax.random.split(key)
        params[name + "_em"] = jax.random.normal(
            sub, (cfg["vocab_dim"], cfg["embed_dim"]), dtype=jnp.float32)
    return params


def reference_forward(attr, params):
    """Pure-JAX reference matching the PyTorch forward semantics."""
    em_list = []
    for name, _ in EMBED_DICT.items():
        tbl = params[name + "_em"]
        ids = attr[name].reshape(-1)
        em_list.append(jnp.take(tbl, ids, axis=0))           # (B, embed_dim)
    em_list.append(attr["cumul_dist_m"].reshape(-1, 1).astype(jnp.float32))
    return jnp.concatenate(em_list, axis=1)


if __name__ == "__main__":
    key = jax.random.PRNGKey(0)
    kp, k1, k2, k3 = jax.random.split(key, 4)
    params = init_params(kp)

    # Built once at init, reused for every forward call.
    fused_table = build_fused_table(params)

    B = 16
    attr = {
        "timeID": jax.random.randint(
            k1, (B,), 0, EMBED_DICT["timeID"]["vocab_dim"], dtype=jnp.int32),
        "weekID": jax.random.randint(
            k2, (B,), 0, EMBED_DICT["weekID"]["vocab_dim"], dtype=jnp.int32),
        "cumul_dist_m": jax.random.normal(k3, (B,), dtype=jnp.float32),
    }

    # tile_b=8 -> 2 grid steps even at this small demo batch (production
    # default is 512).
    out = attr_net_forward(attr, fused_table, tile_b=8)
    out = jax.block_until_ready(out)

    ref = reference_forward(attr, params)
    assert out.shape == (B, out_size()), out.shape
    assert jnp.allclose(out, ref, atol=1e-5, rtol=1e-5), "mismatch vs reference"
    print("KERNEL_OK")
</pallas_src>

<mosaic_0001>
module attributes {stable_mosaic.version = 11 : i64} {
  func.func @_attr_kernel(%arg0: i32, %arg1: memref<8x2xi32, #tpu.memory_space<vmem>>, %arg2: memref<8x1xf32, #tpu.memory_space<vmem>>, %arg3: memref<1536x13xf32, #tpu.memory_space<vmem>>, %arg4: memref<8x13xf32, #tpu.memory_space<vmem>>) attributes {dimension_semantics = [#tpu.dimension_semantics<parallel>], iteration_bounds = array<i64: 2>, scalar_prefetch = 0 : i64, scratch_operands = 0 : i64, tpu.core_type = #tpu.core_type<tc>, window_params = [{transform_indices = @transform_0, window_bounds = array<i64: 8, 2>}, {transform_indices = @transform_1, window_bounds = array<i64: 8, 1>}, {pipeline_mode = #tpu.pipeline_mode<synchronous>, transform_indices = @transform_2, window_bounds = array<i64: 1536, 13>}, {transform_indices = @transform_3, window_bounds = array<i64: 8, 13>}]} {
    %0 = tpu.iota {dimensions = array<i32: 1>} : vector<8x256xi32>
    %cst = arith.constant 0.000000e+00 : f32
    %1 = vector.broadcast %cst : f32 to vector<8x13xf32>
    %c0 = arith.constant 0 : index
    %c0_0 = arith.constant 0 : index
    %2 = vector.load %arg1[%c0, %c0_0] : memref<8x2xi32, #tpu.memory_space<vmem>>, vector<8x1xi32>
    %c0_i32 = arith.constant 0 : i32
    %3 = vector.broadcast %c0_i32 : i32 to vector<8x1xi32>
    %4 = arith.addi %2, %3 : vector<8x1xi32>
    %5 = vector.broadcast %4 : vector<8x1xi32> to vector<8x256xi32>
    %6 = arith.cmpi eq, %0, %5 : vector<8x256xi32>
    %7 = arith.extui %6 : vector<8x256xi1> to vector<8x256xi32>
    %8 = arith.sitofp %7 : vector<8x256xi32> to vector<8x256xf32>
    %c0_1 = arith.constant 0 : index
    %c0_2 = arith.constant 0 : index
    %9 = vector.load %arg3[%c0_1, %c0_2] : memref<1536x13xf32, #tpu.memory_space<vmem>>, vector<256x13xf32>
    %cst_3 = arith.constant dense<0.000000e+00> : vector<8x13xf32>
    %10 = tpu.matmul %8, %9, %cst_3 {dimension_numbers = #tpu.dot_dimension_numbers<[1], [0], [0], [1], [0, 0, 1, 1], [], []>} : vector<8x256xf32>, vector<256x13xf32>, vector<8x13xf32> -> vector<8x13xf32>
    %11 = arith.addf %1, %10 : vector<8x13xf32>
    %c0_4 = arith.constant 0 : index
    %c0_5 = arith.constant 0 : index
    %12 = vector.load %arg1[%c0_4, %c0_5] : memref<8x2xi32, #tpu.memory_space<vmem>>, vector<8x1xi32>
    %c-256_i32 = arith.constant -256 : i32
    %13 = vector.broadcast %c-256_i32 : i32 to vector<8x1xi32>
    %14 = arith.addi %12, %13 : vector<8x1xi32>
    %15 = vector.broadcast %14 : vector<8x1xi32> to vector<8x256xi32>
    %16 = arith.cmpi eq, %0, %15 : vector<8x256xi32>
    %17 = arith.extui %16 : vector<8x256xi1> to vector<8x256xi32>
    %18 = arith.sitofp %17 : vector<8x256xi32> to vector<8x256xf32>
    %c256 = arith.constant 256 : index
    %c0_6 = arith.constant 0 : index
    %19 = vector.load %arg3[%c256, %c0_6] : memref<1536x13xf32, #tpu.memory_space<vmem>>, vector<256x13xf32>
    %cst_7 = arith.constant dense<0.000000e+00> : vector<8x13xf32>
    %20 = tpu.matmul %18, %19, %cst_7 {dimension_numbers = #tpu.dot_dimension_numbers<[1], [0], [0], [1], [0, 0, 1, 1], [], []>} : vector<8x256xf32>, vector<256x13xf32>, vector<8x13xf32> -> vector<8x13xf32>
    %21 = arith.addf %11, %20 : vector<8x13xf32>
    %c0_8 = arith.constant 0 : index
    %c0_9 = arith.constant 0 : index
    %22 = vector.load %arg1[%c0_8, %c0_9] : memref<8x2xi32, #tpu.memory_space<vmem>>, vector<8x1xi32>
    %c-512_i32 = arith.constant -512 : i32
    %23 = vector.broadcast %c-512_i32 : i32 to vector<8x1xi32>
    %24 = arith.addi %22, %23 : vector<8x1xi32>
    %25 = vector.broadcast %24 : vector<8x1xi32> to vector<8x256xi32>
    %26 = arith.cmpi eq, %0, %25 : vector<8x256xi32>
    %27 = arith.extui %26 : vector<8x256xi1> to vector<8x256xi32>
    %28 = arith.sitofp %27 : vector<8x256xi32> to vector<8x256xf32>
    %c512 = arith.constant 512 : index
    %c0_10 = arith.constant 0 : index
    %29 = vector.load %arg3[%c512, %c0_10] : memref<1536x13xf32, #tpu.memory_space<vmem>>, vector<256x13xf32>
    %cst_11 = arith.constant dense<0.000000e+00> : vector<8x13xf32>
    %30 = tpu.matmul %28, %29, %cst_11 {dimension_numbers = #tpu.dot_dimension_numbers<[1], [0], [0], [1], [0, 0, 1, 1], [], []>} : vector<8x256xf32>, vector<256x13xf32>, vector<8x13xf32> -> vector<8x13xf32>
    %31 = arith.addf %21, %30 : vector<8x13xf32>
    %c0_12 = arith.constant 0 : index
    %c0_13 = arith.constant 0 : index
    %32 = vector.load %arg1[%c0_12, %c0_13] : memref<8x2xi32, #tpu.memory_space<vmem>>, vector<8x1xi32>
    %c-768_i32 = arith.constant -768 : i32
    %33 = vector.broadcast %c-768_i32 : i32 to vector<8x1xi32>
    %34 = arith.addi %32, %33 : vector<8x1xi32>
    %35 = vector.broadcast %34 : vector<8x1xi32> to vector<8x256xi32>
    %36 = arith.cmpi eq, %0, %35 : vector<8x256xi32>
    %37 = arith.extui %36 : vector<8x256xi1> to vector<8x256xi32>
    %38 = arith.sitofp %37 : vector<8x256xi32> to vector<8x256xf32>
    %c768 = arith.constant 768 : index
    %c0_14 = arith.constant 0 : index
    %39 = vector.load %arg3[%c768, %c0_14] : memref<1536x13xf32, #tpu.memory_space<vmem>>, vector<256x13xf32>
    %cst_15 = arith.constant dense<0.000000e+00> : vector<8x13xf32>
    %40 = tpu.matmul %38, %39, %cst_15 {dimension_numbers = #tpu.dot_dimension_numbers<[1], [0], [0], [1], [0, 0, 1, 1], [], []>} : vector<8x256xf32>, vector<256x13xf32>, vector<8x13xf32> -> vector<8x13xf32>
    %41 = arith.addf %31, %40 : vector<8x13xf32>
    %c0_16 = arith.constant 0 : index
    %c0_17 = arith.constant 0 : index
    %42 = vector.load %arg1[%c0_16, %c0_17] : memref<8x2xi32, #tpu.memory_space<vmem>>, vector<8x1xi32>
    %c-1024_i32 = arith.constant -1024 : i32
    %43 = vector.broadcast %c-1024_i32 : i32 to vector<8x1xi32>
    %44 = arith.addi %42, %43 : vector<8x1xi32>
    %45 = vector.broadcast %44 : vector<8x1xi32> to vector<8x256xi32>
    %46 = arith.cmpi eq, %0, %45 : vector<8x256xi32>
    %47 = arith.extui %46 : vector<8x256xi1> to vector<8x256xi32>
    %48 = arith.sitofp %47 : vector<8x256xi32> to vector<8x256xf32>
    %c1024 = arith.constant 1024 : index
    %c0_18 = arith.constant 0 : index
    %49 = vector.load %arg3[%c1024, %c0_18] : memref<1536x13xf32, #tpu.memory_space<vmem>>, vector<256x13xf32>
    %cst_19 = arith.constant dense<0.000000e+00> : vector<8x13xf32>
    %50 = tpu.matmul %48, %49, %cst_19 {dimension_numbers = #tpu.dot_dimension_numbers<[1], [0], [0], [1], [0, 0, 1, 1], [], []>} : vector<8x256xf32>, vector<256x13xf32>, vector<8x13xf32> -> vector<8x13xf32>
    %51 = arith.addf %41, %50 : vector<8x13xf32>
    %c0_20 = arith.constant 0 : index
    %c0_21 = arith.constant 0 : index
    %52 = vector.load %arg1[%c0_20, %c0_21] : memref<8x2xi32, #tpu.memory_space<vmem>>, vector<8x1xi32>
    %c-1280_i32 = arith.constant -1280 : i32
    %53 = vector.broadcast %c-1280_i32 : i32 to vector<8x1xi32>
    %54 = arith.addi %52, %53 : vector<8x1xi32>
    %55 = vector.broadcast %54 : vector<8x1xi32> to vector<8x256xi32>
    %56 = arith.cmpi eq, %0, %55 : vector<8x256xi32>
    %c0_22 = arith.constant 0 : index
    %c1 = arith.constant 1 : index
    %57 = vector.load %arg1[%c0_22, %c1] : memref<8x2xi32, #tpu.memory_space<vmem>>, vector<8x1xi32>
    %c160_i32 = arith.constant 160 : i32
    %58 = vector.broadcast %c160_i32 : i32 to vector<8x1xi32>
    %59 = arith.addi %57, %58 : vector<8x1xi32>
    %60 = vector.broadcast %59 : vector<8x1xi32> to vector<8x256xi32>
    %61 = arith.cmpi eq, %0, %60 : vector<8x256xi32>
    %62 = arith.ori %56, %61 : vector<8x256xi1>
    %63 = arith.extui %62 : vector<8x256xi1> to vector<8x256xi32>
    %64 = arith.sitofp %63 : vector<8x256xi32> to vector<8x256xf32>
    %c1280 = arith.constant 1280 : index
    %c0_23 = arith.constant 0 : index
    %65 = vector.load %arg3[%c1280, %c0_23] : memref<1536x13xf32, #tpu.memory_space<vmem>>, vector<256x13xf32>
    %cst_24 = arith.constant dense<0.000000e+00> : vector<8x13xf32>
    %66 = tpu.matmul %64, %65, %cst_24 {dimension_numbers = #tpu.dot_dimension_numbers<[1], [0], [0], [1], [0, 0, 1, 1], [], []>} : vector<8x256xf32>, vector<256x13xf32>, vector<8x13xf32> -> vector<8x13xf32>
    %67 = arith.addf %51, %66 : vector<8x13xf32>
    %c0_25 = arith.constant 0 : index
    %c0_26 = arith.constant 0 : index
    %68 = vector.load %arg4[%c0_25, %c0_26] : memref<8x13xf32, #tpu.memory_space<vmem>>, vector<8x13xf32>
    tpu.vector_store %arg4[%c0_25, %c0_26], %67 {strides = array<i32>} : memref<8x13xf32, #tpu.memory_space<vmem>>, vector<8x13xf32>,
    %c0_27 = arith.constant 0 : index
    %c0_28 = arith.constant 0 : index
    %69 = vector.load %arg2[%c0_27, %c0_28] : memref<8x1xf32, #tpu.memory_space<vmem>>, vector<8x1xf32>
    %c0_29 = arith.constant 0 : index
    %c12 = arith.constant 12 : index
    %70 = vector.load %arg4[%c0_29, %c12] : memref<8x13xf32, #tpu.memory_space<vmem>>, vector<8x1xf32>
    tpu.vector_store %arg4[%c0_29, %c12], %69 {strides = array<i32>} : memref<8x13xf32, #tpu.memory_space<vmem>>, vector<8x1xf32>,
    return
  }
  func.func @transform_0(%arg0: i32) -> (i32, i32) {
    %c0_i32 = arith.constant 0 : i32
    %c0_i32_0 = arith.constant 0 : i32
    return %arg0, %c0_i32 : i32, i32
  }
  func.func @transform_1(%arg0: i32) -> (i32, i32) {
    %c0_i32 = arith.constant 0 : i32
    %c0_i32_0 = arith.constant 0 : i32
    return %arg0, %c0_i32 : i32, i32
  }
  func.func @transform_2(%arg0: i32) -> (i32, i32) {
    %c0_i32 = arith.constant 0 : i32
    %c0_i32_0 = arith.constant 0 : i32
    %c0_i32_1 = arith.constant 0 : i32
    return %c0_i32, %c0_i32_0 : i32, i32
  }
  func.func @transform_3(%arg0: i32) -> (i32, i32) {
    %c0_i32 = arith.constant 0 : i32
    %c0_i32_0 = arith.constant 0 : i32
    return %arg0, %c0_i32 : i32, i32
  }
}

</mosaic_0001>

<llo_original>
// kernel: tpu_custom_call.1
$region0: #{tpu_custom_call.1}
  #allocation0 [shape = 'u32[]', space=smem, size = 0x4, offset = 0x4, fixed_abs, tag = 'smem constant byte address 0x4 - core index']
  #allocation1 [shape = 'u32[144,128]{1,0:T(1,128)}', space=vmem, size = 0x12000, scoped, tag = 'internal scratch']
  %s0 = inlined_call_operand.vmem [shape: s32[16,2], index: 0, kind: input, shape index: {}]
  %s1 = inlined_call_operand.vmem [shape: f32[16,1], index: 1, kind: input, shape index: {}]
  %s2 = inlined_call_operand.vmem [shape: f32[1536,13], index: 2, kind: input, shape index: {}]
  %s3 = inlined_call_operand.hbm [shape: f32[16,13], index: 3, kind: output, shape index: {}]
  %s4 = sld [smem:[#allocation0]]
  $region45: #{tpu_custom_call.1} parent=0
    _
  %s6 = ssub.s32 1, %s4
  %s7 = scalar_select 0, %s6, %s4
  $region1: #{tpu_custom_call.1} parent=0
    #allocation2 [shape = 'u8[8192]{0}', space=vmem, size = 0x2000, scoped, tag = 'output window, operand 0']
    #allocation3 [shape = 's32[2]{0}', space=sflag, size = 0x8, scoped, tag = 'scoped memory for tpu_custom_call.1']
    %8 = vsyncpa [#allocation3], 0
    %s9 = scalar_lea.sflag [#allocation3], 1
    %10 = vsyncpa %s9, 0
    loop: start=0, step=1, limit=4
    $region2: #{tpu_custom_call.1} parent=1 // loop_pre_header
      _
    $region3: #{tpu_custom_call.1} parent=1 // loop_header
      %s12 = sphi 0, %s16
      %p13 = scmp.ge.s32.totalorder %s12, 4
      %s22 = sphi 0, %s24
      %s25 = sphi 0, %s22
      %s26 = sphi 0, %s25
      %s42 = sphi 0, %s26
      %s48 = sphi 0, %s50
      %s51 = sphi 0, %s48
      %s52 = sphi 0, %s51
      %s68 = sphi 0, %s52
      %s72 = sphi 0, %s72
      %s74 = sphi 0, %s72
      %s75 = sphi 0, %s74
      %s89 = sphi 0, %s75
      %s95 = sphi 0, %s97
      %s98 = sphi 0, %s95
      %s99 = sphi 0, %s98
      %s115 = sphi 0, %s99
    $region4: #{tpu_custom_call.1} parent=1 // loop_header_branch
      %15 = sbr.rel (%p13) target = $region8
    $region5: #{tpu_custom_call.1} parent=1 // loop_body
      %s17 = ssub.s32 %s12, 1
      %s18 = ssub.s32 %s12, 2
      %s19 = sadd.s32 %s12, 1
      %s20 = ssub.s32 %s12, %s19
      %p21 = scmp.eq.s32.totalorder %s20, 0
      %s23 = sadd.s32 %s22, 1
      %s24 = scalar_select %p21, %s22, %s23
      %p27 = pneg %p21
      %p28 = scmp.eq.s32.totalorder %s12, 1
      %p29 = por %p27, %p28
      %p30 = scmp.ne.s32.totalorder %s22, %s25
      %p31 = scmp.eq.s32.totalorder %s12, 0
      %p32 = por %p30, %p31
      %p33 = scmp.ne.s32.totalorder %s22, %s25
      %p34 = scmp.eq.s32.totalorder %s17, 1
      %p35 = por %p33, %p34
      %p36 = scmp.ne.s32.totalorder %s25, %s26
      %p37 = scmp.eq.s32.totalorder %s17, 0
      %p38 = por %p36, %p37
      %p39 = scmp.ne.s32.totalorder %s25, %s26
      %p40 = scmp.eq.s32.totalorder %s18, 1
      %p41 = por %p39, %p40
      %p43 = scmp.ne.s32.totalorder %s26, %s42
      %p44 = scmp.eq.s32.totalorder %s18, 0
      %p45 = por %p43, %p44
      %s46 = ssub.s32 %s12, %s19
      %p47 = scmp.eq.s32.totalorder %s46, 0
      %s49 = sadd.s32 %s48, 1
      %s50 = scalar_select %p47, %s48, %s49
      %p53 = pneg %p47
      %p54 = scmp.eq.s32.totalorder %s12, 1
      %p55 = por %p53, %p54
      %p56 = scmp.ne.s32.totalorder %s48, %s51
      %p57 = scmp.eq.s32.totalorder %s12, 0
      %p58 = por %p56, %p57
      %p59 = scmp.ne.s32.totalorder %s48, %s51
      %p60 = scmp.eq.s32.totalorder %s17, 1
      %p61 = por %p59, %p60
      %p62 = scmp.ne.s32.totalorder %s51, %s52
      %p63 = scmp.eq.s32.totalorder %s17, 0
      %p64 = por %p62, %p63
      %p65 = scmp.ne.s32.totalorder %s51, %s52
      %p66 = scmp.eq.s32.totalorder %s18, 1
      %p67 = por %p65, %p66
      %p69 = scmp.ne.s32.totalorder %s52, %s68
      %p70 = scmp.eq.s32.totalorder %s18, 0
      %p71 = por %p69, %p70
      %s73 = sadd.s32 %s72, 1
      %p76 = scmp.eq.s32.totalorder %s12, 1
      %p77 = scmp.ne.s32.totalorder %s72, %s74
      %p78 = scmp.eq.s32.totalorder %s12, 0
      %p79 = por %p77, %p78
      %p80 = scmp.ne.s32.totalorder %s72, %s74
      %p81 = scmp.eq.s32.totalorder %s17, 1
      %p82 = por %p80, %p81
      %p83 = scmp.ne.s32.totalorder %s74, %s75
      %p84 = scmp.eq.s32.totalorder %s17, 0
      %p85 = por %p83, %p84
      %p86 = scmp.ne.s32.totalorder %s74, %s75
      %p87 = scmp.eq.s32.totalorder %s18, 1
      %p88 = por %p86, %p87
      %p90 = scmp.ne.s32.totalorder %s75, %s89
      %p91 = scmp.eq.s32.totalorder %s18, 0
      %p92 = por %p90, %p91
      %s93 = ssub.s32 %s12, %s19
      %p94 = scmp.eq.s32.totalorder %s93, 0
      %s96 = sadd.s32 %s95, 1
      %s97 = scalar_select %p94, %s95, %s96
      %p100 = pneg %p94
      %p101 = scmp.eq.s32.totalorder %s12, 1
      %p102 = por %p100, %p101
      %p103 = scmp.ne.s32.totalorder %s95, %s98
      %p104 = scmp.eq.s32.totalorder %s12, 0
      %p105 = por %p103, %p104
      %p106 = scmp.ne.s32.totalorder %s95, %s98
      %p107 = scmp.eq.s32.totalorder %s17, 1
      %p108 = por %p106, %p107
      %p109 = scmp.ne.s32.totalorder %s98, %s99
      %p110 = scmp.eq.s32.totalorder %s17, 0
      %p111 = por %p109, %p110
      %p112 = scmp.ne.s32.totalorder %s98, %s99
      %p113 = scmp.eq.s32.totalorder %s18, 1
      %p114 = por %p112, %p113
      %p116 = scmp.ne.s32.totalorder %s99, %s115
      %p117 = scmp.eq.s32.totalorder %s18, 0
      %p118 = por %p116, %p117
      %p119 = scmp.le.s32.totalorder 1, %s12
      %p120 = scmp.lt.s32.totalorder %s12, 3
      %p121 = pnand %p119, %p120
      %p122 = pneg %p121
      // Predicated region
      $region9: #{tpu_custom_call.1} parent=5 // pred_check
        _
      $region10: #{tpu_custom_call.1} parent=5 // pred_check_branch
        %124 = sbr.rel (%p121) target = $region12
      $region11: #{tpu_custom_call.1} parent=5 // pred_region
        %s125 = ssub.s32 %s12, 1
        // Predicated region
        $region13: #{tpu_custom_call.1} parent=11 // pred_check
          %p126 = pneg %p85
        $region14: #{tpu_custom_call.1} parent=11 // pred_check_branch
          %128 = sbr.rel (%p126) target = $region16
        $region15: #{tpu_custom_call.1} parent=11 // pred_region
          _
        $region16: #{tpu_custom_call.1} parent=11 // pred_fallthru
          _
      $region12: #{tpu_custom_call.1} parent=5 // pred_fallthru
        _
      %p129 = scmp.lt.s32.totalorder %s12, 2
      // Predicated region
      $region17: #{tpu_custom_call.1} parent=5 // pred_check
        %p130 = pneg %p129
      $region18: #{tpu_custom_call.1} parent=5 // pred_check_branch
        %132 = sbr.rel (%p130) target = $region20
      $region19: #{tpu_custom_call.1} parent=5 // pred_region
        // Predicated region
        $region21: #{tpu_custom_call.1} parent=19 // pred_check
          %p133 = pneg %p32
        $region22: #{tpu_custom_call.1} parent=19 // pred_check_branch
          %135 = sbr.rel (%p133) target = $region24
        $region23: #{tpu_custom_call.1} parent=19 // pred_region
          %p136 = scmp.lt.s32.totalorder %s12, 1
          %s137 = scalar_select %p136, %s12, 1
          %s138 = smul.addr %s137, 8
          %s139 = scalar_lea.vmem %s0, %s138
        $region24: #{tpu_custom_call.1} parent=19 // pred_fallthru
          _
        // Predicated region
        $region25: #{tpu_custom_call.1} parent=19 // pred_check
          %p140 = pneg %p58
        $region26: #{tpu_custom_call.1} parent=19 // pred_check_branch
          %142 = sbr.rel (%p140) target = $region28
        $region27: #{tpu_custom_call.1} parent=19 // pred_region
          %p143 = scmp.lt.s32.totalorder %s12, 1
          %s144 = scalar_select %p143, %s12, 1
          %s145 = smul.addr %s144, 8
          %s146 = scalar_lea.vmem %s1, %s145
        $region28: #{tpu_custom_call.1} parent=19 // pred_fallthru
          _
      $region20: #{tpu_custom_call.1} parent=5 // pred_fallthru
        _
      %p147 = scmp.le.s32.totalorder 1, %s12
      %p148 = scmp.lt.s32.totalorder %s12, 3
      %p149 = pnand %p147, %p148
      %p150 = pneg %p149
      // Predicated region
      $region29: #{tpu_custom_call.1} parent=5 // pred_check
        _
      $region30: #{tpu_custom_call.1} parent=5 // pred_check_branch
        %152 = sbr.rel (%p149) target = $region32
      $region31: #{tpu_custom_call.1} parent=5 // pred_region
        %s153 = ssub.s32 %s12, 1
        %p154 = scmp.lt.s32.totalorder %s17, 1
        %s155 = scalar_select %p154, %s17, 1
        %s156 = smul.addr %s155, 8
        %s157 = scalar_lea.vmem %s0, %s156
        %p158 = pneg %p38
        %p159 = pneg %p35
        %p160 = scmp.lt.s32.totalorder %s17, 1
        %s161 = scalar_select %p160, %s17, 1
        %s162 = smul.addr %s161, 8
        %s163 = scalar_lea.vmem %s1, %s162
        %p164 = pneg %p64
        %p165 = pneg %p61
        %p166 = pneg %p85
        %p167 = pneg %p82
        %p168 = pneg %p111
        %p169 = pneg %p108
        %s170 = sand.u32 %s98, 1
        %s171 = scalar_lea.sflag [#allocation3], %s170
        %s172 = sand.u32 %s98, 1
        %s173 = smul.addr %s172, 8
        %s174 = scalar_lea.vmem [#allocation2], %s173
        %p175 = scmp.lt.s32.totalorder %s17, 1
        %s176 = scalar_select %p175, %s17, 1
        %s177 = smul.addr %s176, 8
        %s178 = scalar_lea.vmem %s0, %s177
        %p179 = scmp.lt.s32.totalorder %s17, 1
        %s180 = scalar_select %p179, %s17, 1
        %s181 = smul.addr %s180, 8
        %s182 = scalar_lea.vmem %s1, %s181
        %v183 = vlaneseq
        %v184 = vand.u32 %v183, 127
        %v185 = vadd.s32 %v184, 128
        %v186 = vld [vmem:[%s178] sm:$0xff]
        %187 = vset.pattern.permute.xlu0 0
        %188 = vperm.xlu0 %187, %v186
        %v189 = vpop.permute.xlu0 %188
        %vm190 = vcmp.eq.s32.totalorder %v184, %v189
        %vm191 = vcmp.eq.s32.totalorder %v185, %v189
        %v192 = vsel %vm190, 1, 0
        %v193 = vsel %vm191, 1, 0
        %v194 = vcvt.s32.f32 %v192
        %v195 = vcvt.s32.f32 %v193
        %v196 = vld [vmem:[%s2] sm:$0xff]
        %v197 = vld [vmem:[%s2 + $0x8] sm:$0xff]
        %v198 = vld [vmem:[%s2 + $0x10] sm:$0xff]
        %v199 = vld [vmem:[%s2 + $0x18] sm:$0xff]
        %v200 = vld [vmem:[%s2 + $0x20] sm:$0xff]
        %v201 = vld [vmem:[%s2 + $0x28] sm:$0xff]
        %v202 = vld [vmem:[%s2 + $0x30] sm:$0xff]
        %v203 = vld [vmem:[%s2 + $0x38] sm:$0xff]
        %v204 = vld [vmem:[%s2 + $0x40] sm:$0xff]
        %v205 = vld [vmem:[%s2 + $0x48] sm:$0xff]
        %v206 = vld [vmem:[%s2 + $0x50] sm:$0xff]
        %v207 = vld [vmem:[%s2 + $0x58] sm:$0xff]
        %v208 = vld [vmem:[%s2 + $0x60] sm:$0xff]
        %v209 = vld [vmem:[%s2 + $0x68] sm:$0xff]
        %v210 = vld [vmem:[%s2 + $0x70] sm:$0xff]
        %v211 = vld [vmem:[%s2 + $0x78] sm:$0xff]
        %v212 = vld [vmem:[%s2 + $0x80] sm:$0xff]
        %v213 = vld [vmem:[%s2 + $0x88] sm:$0xff]
        %v214 = vld [vmem:[%s2 + $0x90] sm:$0xff]
        %v215 = vld [vmem:[%s2 + $0x98] sm:$0xff]
        %v216 = vld [vmem:[%s2 + $0xa0] sm:$0xff]
        %v217 = vld [vmem:[%s2 + $0xa8] sm:$0xff]
        %v218 = vld [vmem:[%s2 + $0xb0] sm:$0xff]
        %v219 = vld [vmem:[%s2 + $0xb8] sm:$0xff]
        %v220 = vld [vmem:[%s2 + $0xc0] sm:$0xff]
        %v221 = vld [vmem:[%s2 + $0xc8] sm:$0xff]
        %v222 = vld [vmem:[%s2 + $0xd0] sm:$0xff]
        %v223 = vld [vmem:[%s2 + $0xd8] sm:$0xff]
        %v224 = vld [vmem:[%s2 + $0xe0] sm:$0xff]
        %v225 = vld [vmem:[%s2 + $0xe8] sm:$0xff]
        %v226 = vld [vmem:[%s2 + $0xf0] sm:$0xff]
        %v227 = vld [vmem:[%s2 + $0xf8] sm:$0xff]
        %v228 = vadd.s32 %v186, 4294967040
        %229 = vset.pattern.permute.xlu0 0
        %230 = vperm.xlu0 %229, %v228
        %v231 = vpop.permute.xlu0 %230
        %vm232 = vcmp.eq.s32.totalorder %v184, %v231
        %vm233 = vcmp.eq.s32.totalorder %v185, %v231
        %v234 = vsel %vm232, 1, 0
        %v235 = vsel %vm233, 1, 0
        %v236 = vcvt.s32.f32 %v234
        %v237 = vcvt.s32.f32 %v235
        %v238 = vld [vmem:[%s2 + $0x100] sm:$0xff]
        %v239 = vld [vmem:[%s2 + $0x108] sm:$0xff]
        %v240 = vld [vmem:[%s2 + $0x110] sm:$0xff]
        %v241 = vld [vmem:[%s2 + $0x118] sm:$0xff]
        %v242 = vld [vmem:[%s2 + $0x120] sm:$0xff]
        %v243 = vld [vmem:[%s2 + $0x128] sm:$0xff]
        %v244 = vld [vmem:[%s2 + $0x130] sm:$0xff]
        %v245 = vld [vmem:[%s2 + $0x138] sm:$0xff]
        %v246 = vld [vmem:[%s2 + $0x140] sm:$0xff]
        %v247 = vld [vmem:[%s2 + $0x148] sm:$0xff]
        %v248 = vld [vmem:[%s2 + $0x150] sm:$0xff]
        %v249 = vld [vmem:[%s2 + $0x158] sm:$0xff]
        %v250 = vld [vmem:[%s2 + $0x160] sm:$0xff]
        %v251 = vld [vmem:[%s2 + $0x168] sm:$0xff]
        %v252 = vld [vmem:[%s2 + $0x170] sm:$0xff]
        %v253 = vld [vmem:[%s2 + $0x178] sm:$0xff]
        %v254 = vld [vmem:[%s2 + $0x180] sm:$0xff]
        %v255 = vld [vmem:[%s2 + $0x188] sm:$0xff]
        %v256 = vld [vmem:[%s2 + $0x190] sm:$0xff]
        %v257 = vld [vmem:[%s2 + $0x198] sm:$0xff]
        %v258 = vld [vmem:[%s2 + $0x1a0] sm:$0xff]
        %v259 = vld [vmem:[%s2 + $0x1a8] sm:$0xff]
        %v260 = vld [vmem:[%s2 + $0x1b0] sm:$0xff]
        %v261 = vld [vmem:[%s2 + $0x1b8] sm:$0xff]
        %v262 = vld [vmem:[%s2 + $0x1c0] sm:$0xff]
        %v263 = vld [vmem:[%s2 + $0x1c8] sm:$0xff]
        %v264 = vld [vmem:[%s2 + $0x1d0] sm:$0xff]
        %v265 = vld [vmem:[%s2 + $0x1d8] sm:$0xff]
        %v266 = vld [vmem:[%s2 + $0x1e0] sm:$0xff]
        %v267 = vld [vmem:[%s2 + $0x1e8] sm:$0xff]
        %v268 = vld [vmem:[%s2 + $0x1f0] sm:$0xff]
        %v269 = vld [vmem:[%s2 + $0x1f8] sm:$0xff]
        %270 = vmatprep.subr.mxu0 0.0
        %271 = vmatpush1.msra.mxu0 %v253
        %272 = vmatprep.subr.mxu0 0.0
        %273 = vmatpush1.msra.mxu0 %v252
        %274 = vmatprep.subr.mxu0 0.0
        %275 = vmatpush1.msra.mxu0 %v251
        %276 = vmatprep.subr.mxu0 0.0
        %277 = vmatpush1.msra.mxu0 %v250
        %278 = vmatprep.subr.mxu0 0.0
        %279 = vmatpush1.msra.mxu0 %v249
        %280 = vmatprep.subr.mxu0 0.0
        %281 = vmatpush1.msra.mxu0 %v248
        %282 = vmatprep.subr.mxu0 0.0
        %283 = vmatpush1.msra.mxu0 %v247
        %284 = vmatprep.subr.mxu0 0.0
        %285 = vmatpush1.msra.mxu0 %v246
        %286 = vmatprep.subr.mxu0 0.0
        %287 = vmatpush1.msra.mxu0 %v245
        %288 = vmatprep.subr.mxu0 0.0
        %289 = vmatpush1.msra.mxu0 %v244
        %290 = vmatprep.subr.mxu0 0.0
        %291 = vmatpush1.msra.mxu0 %v243
        %292 = vmatprep.subr.mxu0 0.0
        %293 = vmatpush1.msra.mxu0 %v242
        %294 = vmatprep.subr.mxu0 0.0
        %295 = vmatpush1.msra.mxu0 %v241
        %296 = vmatprep.subr.mxu0 0.0
        %297 = vmatpush1.msra.mxu0 %v240
        %298 = vmatprep.subr.mxu0 0.0
        %299 = vmatpush1.msra.mxu0 %v239
        %300 = vmatprep.subr.mxu0 0.0
        %301 = vmatpush1.msra.mxu0 %v238
        %302 = vmatprep.subr.mxu0 0.0
        %303 = vmatpush2.msra.mxu0 %v269
        %304 = vmatprep.subr.mxu0 0.0
        %305 = vmatpush2.msra.mxu0 %v268
        %306 = vmatprep.subr.mxu0 0.0
        %307 = vmatpush2.msra.mxu0 %v267
        %308 = vmatprep.subr.mxu0 0.0
        %309 = vmatpush2.msra.mxu0 %v266
        %310 = vmatprep.subr.mxu0 0.0
        %311 = vmatpush2.msra.mxu0 %v265
        %312 = vmatprep.subr.mxu0 0.0
        %313 = vmatpush2.msra.mxu0 %v264
        %314 = vmatprep.subr.mxu0 0.0
        %315 = vmatpush2.msra.mxu0 %v263
        %316 = vmatprep.subr.mxu0 0.0
        %317 = vmatpush2.msra.mxu0 %v262
        %318 = vmatprep.subr.mxu0 0.0
        %319 = vmatpush2.msra.mxu0 %v261
        %320 = vmatprep.subr.mxu0 0.0
        %321 = vmatpush2.msra.mxu0 %v260
        %322 = vmatprep.subr.mxu0 0.0
        %323 = vmatpush2.msra.mxu0 %v259
        %324 = vmatprep.subr.mxu0 0.0
        %325 = vmatpush2.msra.mxu0 %v258
        %326 = vmatprep.subr.mxu0 0.0
        %327 = vmatpush2.msra.mxu0 %v257
        %328 = vmatprep.subr.mxu0 0.0
        %329 = vmatpush2.msra.mxu0 %v256
        %330 = vmatprep.subr.mxu0 0.0
        %331 = vmatpush2.msra.mxu0 %v255
        %332 = vmatprep.subr.mxu0 0.0
        %333 = vmatpush2.msra.mxu0 %v254
        %334 = vmatprep.mubr.f32.mxu0 %v237
        %335 = vmatmul.mubr.f32.gmra.mxu0 %v236
        %v336 = vpop.f32.mrf.mxu0
        %v337 = vadd.f32 0.0, %v336
        %v338 = vpop.f32.mrf.mxu0
        %339 = vdwg.mxu0
        %340 = vmatprep.subr.mxu0 0.0
        %341 = vmatpush1.msra.mxu0 %v211
        %342 = vmatprep.subr.mxu0 0.0
        %343 = vmatpush1.msra.mxu0 %v210
        %344 = vmatprep.subr.mxu0 0.0
        %345 = vmatpush1.msra.mxu0 %v209
        %346 = vmatprep.subr.mxu0 0.0
        %347 = vmatpush1.msra.mxu0 %v208
        %348 = vmatprep.subr.mxu0 0.0
        %349 = vmatpush1.msra.mxu0 %v207
        %350 = vmatprep.subr.mxu0 0.0
        %351 = vmatpush1.msra.mxu0 %v206
        %352 = vmatprep.subr.mxu0 0.0
        %353 = vmatpush1.msra.mxu0 %v205
        %354 = vmatprep.subr.mxu0 0.0
        %355 = vmatpush1.msra.mxu0 %v204
        %356 = vmatprep.subr.mxu0 0.0
        %357 = vmatpush1.msra.mxu0 %v203
        %358 = vmatprep.subr.mxu0 0.0
        %359 = vmatpush1.msra.mxu0 %v202
        %360 = vmatprep.subr.mxu0 0.0
        %361 = vmatpush1.msra.mxu0 %v201
        %362 = vmatprep.subr.mxu0 0.0
        %363 = vmatpush1.msra.mxu0 %v200
        %364 = vmatprep.subr.mxu0 0.0
        %365 = vmatpush1.msra.mxu0 %v199
        %366 = vmatprep.subr.mxu0 0.0
        %367 = vmatpush1.msra.mxu0 %v198
        %368 = vmatprep.subr.mxu0 0.0
        %369 = vmatpush1.msra.mxu0 %v197
        %370 = vmatprep.subr.mxu0 0.0
        %371 = vmatpush1.msra.mxu0 %v196
        %372 = vmatprep.subr.mxu0 0.0
        %373 = vmatpush2.msra.mxu0 %v227
        %374 = vmatprep.subr.mxu0 0.0
        %375 = vmatpush2.msra.mxu0 %v226
        %376 = vmatprep.subr.mxu0 0.0
        %377 = vmatpush2.msra.mxu0 %v225
        %378 = vmatprep.subr.mxu0 0.0
        %379 = vmatpush2.msra.mxu0 %v224
        %380 = vmatprep.subr.mxu0 0.0
        %381 = vmatpush2.msra.mxu0 %v223
        %382 = vmatprep.subr.mxu0 0.0
        %383 = vmatpush2.msra.mxu0 %v222
        %384 = vmatprep.subr.mxu0 0.0
        %385 = vmatpush2.msra.mxu0 %v221
        %386 = vmatprep.subr.mxu0 0.0
        %387 = vmatpush2.msra.mxu0 %v220
        %388 = vmatprep.subr.mxu0 0.0
        %389 = vmatpush2.msra.mxu0 %v219
        %390 = vmatprep.subr.mxu0 0.0
        %391 = vmatpush2.msra.mxu0 %v218
        %392 = vmatprep.subr.mxu0 0.0
        %393 = vmatpush2.msra.mxu0 %v217
        %394 = vmatprep.subr.mxu0 0.0
        %395 = vmatpush2.msra.mxu0 %v216
        %396 = vmatprep.subr.mxu0 0.0
        %397 = vmatpush2.msra.mxu0 %v215
        %398 = vmatprep.subr.mxu0 0.0
        %399 = vmatpush2.msra.mxu0 %v214
        %400 = vmatprep.subr.mxu0 0.0
        %401 = vmatpush2.msra.mxu0 %v213
        %402 = vmatprep.subr.mxu0 0.0
        %403 = vmatpush2.msra.mxu0 %v212
        %404 = vmatprep.mubr.f32.mxu0 %v195
        %405 = vmatmul.mubr.f32.gmra.mxu0 %v194
        %v406 = vpop.f32.mrf.mxu0
        %v407 = vadd.f32 %v337, %v406
        %v408 = vpop.f32.mrf.mxu0
        %409 = vdwg.mxu0
        %v410 = vadd.s32 %v186, 4294966784
        %411 = vset.pattern.permute.xlu0 0
        %412 = vperm.xlu0 %411, %v410
        %v413 = vpop.permute.xlu0 %412
        %vm414 = vcmp.eq.s32.totalorder %v184, %v413
        %vm415 = vcmp.eq.s32.totalorder %v185, %v413
        %v416 = vsel %vm414, 1, 0
        %v417 = vsel %vm415, 1, 0
        %v418 = vcvt.s32.f32 %v416
        %v419 = vcvt.s32.f32 %v417
        %v420 = vld [vmem:[%s2 + $0x200] sm:$0xff]
        %v421 = vld [vmem:[%s2 + $0x208] sm:$0xff]
        %v422 = vld [vmem:[%s2 + $0x210] sm:$0xff]
        %v423 = vld [vmem:[%s2 + $0x218] sm:$0xff]
        %v424 = vld [vmem:[%s2 + $0x220] sm:$0xff]
        %v425 = vld [vmem:[%s2 + $0x228] sm:$0xff]
        %v426 = vld [vmem:[%s2 + $0x230] sm:$0xff]
        %v427 = vld [vmem:[%s2 + $0x238] sm:$0xff]
        %v428 = vld [vmem:[%s2 + $0x240] sm:$0xff]
        %v429 = vld [vmem:[%s2 + $0x248] sm:$0xff]
        %v430 = vld [vmem:[%s2 + $0x250] sm:$0xff]
        %v431 = vld [vmem:[%s2 + $0x258] sm:$0xff]
        %v432 = vld [vmem:[%s2 + $0x260] sm:$0xff]
        %v433 = vld [vmem:[%s2 + $0x268] sm:$0xff]
        %v434 = vld [vmem:[%s2 + $0x270] sm:$0xff]
        %v435 = vld [vmem:[%s2 + $0x278] sm:$0xff]
        %v436 = vld [vmem:[%s2 + $0x280] sm:$0xff]
        %v437 = vld [vmem:[%s2 + $0x288] sm:$0xff]
        %v438 = vld [vmem:[%s2 + $0x290] sm:$0xff]
        %v439 = vld [vmem:[%s2 + $0x298] sm:$0xff]
        %v440 = vld [vmem:[%s2 + $0x2a0] sm:$0xff]
        %v441 = vld [vmem:[%s2 + $0x2a8] sm:$0xff]
        %v442 = vld [vmem:[%s2 + $0x2b0] sm:$0xff]
        %v443 = vld [vmem:[%s2 + $0x2b8] sm:$0xff]
        %v444 = vld [vmem:[%s2 + $0x2c0] sm:$0xff]
        %v445 = vld [vmem:[%s2 + $0x2c8] sm:$0xff]
        %v446 = vld [vmem:[%s2 + $0x2d0] sm:$0xff]
        %v447 = vld [vmem:[%s2 + $0x2d8] sm:$0xff]
        %v448 = vld [vmem:[%s2 + $0x2e0] sm:$0xff]
        %v449 = vld [vmem:[%s2 + $0x2e8] sm:$0xff]
        %v450 = vld [vmem:[%s2 + $0x2f0] sm:$0xff]
        %v451 = vld [vmem:[%s2 + $0x2f8] sm:$0xff]
        %452 = vmatprep.subr.mxu0 0.0
        %453 = vmatpush1.msra.mxu0 %v435
        %454 = vmatprep.subr.mxu0 0.0
        %455 = vmatpush1.msra.mxu0 %v434
        %456 = vmatprep.subr.mxu0 0.0
        %457 = vmatpush1.msra.mxu0 %v433
        %458 = vmatprep.subr.mxu0 0.0
        %459 = vmatpush1.msra.mxu0 %v432
        %460 = vmatprep.subr.mxu0 0.0
        %461 = vmatpush1.msra.mxu0 %v431
        %462 = vmatprep.subr.mxu0 0.0
        %463 = vmatpush1.msra.mxu0 %v430
        %464 = vmatprep.subr.mxu0 0.0
        %465 = vmatpush1.msra.mxu0 %v429
        %466 = vmatprep.subr.mxu0 0.0
        %467 = vmatpush1.msra.mxu0 %v428
        %468 = vmatprep.subr.mxu0 0.0
        %469 = vmatpush1.msra.mxu0 %v427
        %470 = vmatprep.subr.mxu0 0.0
        %471 = vmatpush1.msra.mxu0 %v426
        %472 = vmatprep.subr.mxu0 0.0
        %473 = vmatpush1.msra.mxu0 %v425
        %474 = vmatprep.subr.mxu0 0.0
        %475 = vmatpush1.msra.mxu0 %v424
        %476 = vmatprep.subr.mxu0 0.0
        %477 = vmatpush1.msra.mxu0 %v423
        %478 = vmatprep.subr.mxu0 0.0
        %479 = vmatpush1.msra.mxu0 %v422
        %480 = vmatprep.subr.mxu0 0.0
        %481 = vmatpush1.msra.mxu0 %v421
        %482 = vmatprep.subr.mxu0 0.0
        %483 = vmatpush1.msra.mxu0 %v420
        %484 = vmatprep.subr.mxu0 0.0
        %485 = vmatpush2.msra.mxu0 %v451
        %486 = vmatprep.subr.mxu0 0.0
        %487 = vmatpush2.msra.mxu0 %v450
        %488 = vmatprep.subr.mxu0 0.0
        %489 = vmatpush2.msra.mxu0 %v449
        %490 = vmatprep.subr.mxu0 0.0
        %491 = vmatpush2.msra.mxu0 %v448
        %492 = vmatprep.subr.mxu0 0.0
        %493 = vmatpush2.msra.mxu0 %v447
        %494 = vmatprep.subr.mxu0 0.0
        %495 = vmatpush2.msra.mxu0 %v446
        %496 = vmatprep.subr.mxu0 0.0
        %497 = vmatpush2.msra.mxu0 %v445
        %498 = vmatprep.subr.mxu0 0.0
        %499 = vmatpush2.msra.mxu0 %v444
        %500 = vmatprep.subr.mxu0 0.0
        %501 = vmatpush2.msra.mxu0 %v443
        %502 = vmatprep.subr.mxu0 0.0
        %503 = vmatpush2.msra.mxu0 %v442
        %504 = vmatprep.subr.mxu0 0.0
        %505 = vmatpush2.msra.mxu0 %v441
        %506 = vmatprep.subr.mxu0 0.0
        %507 = vmatpush2.msra.mxu0 %v440
        %508 = vmatprep.subr.mxu0 0.0
        %509 = vmatpush2.msra.mxu0 %v439
        %510 = vmatprep.subr.mxu0 0.0
        %511 = vmatpush2.msra.mxu0 %v438
        %512 = vmatprep.subr.mxu0 0.0
        %513 = vmatpush2.msra.mxu0 %v437
        %514 = vmatprep.subr.mxu0 0.0
        %515 = vmatpush2.msra.mxu0 %v436
        %516 = vmatprep.mubr.f32.mxu0 %v419
        %517 = vmatmul.mubr.f32.gmra.mxu0 %v418
        %v518 = vpop.f32.mrf.mxu0
        %v519 = vadd.f32 0.0, %v518
        %v520 = vpop.f32.mrf.mxu0
        %521 = vdwg.mxu0
        %v522 = vadd.f32 %v407, %v519
        %v523 = vadd.s32 %v186, 4294966528
        %524 = vset.pattern.permute.xlu0 0
        %525 = vperm.xlu0 %524, %v523
        %v526 = vpop.permute.xlu0 %525
        %vm527 = vcmp.eq.s32.totalorder %v184, %v526
        %vm528 = vcmp.eq.s32.totalorder %v185, %v526
        %v529 = vsel %vm527, 1, 0
        %v530 = vsel %vm528, 1, 0
        %v531 = vcvt.s32.f32 %v529
        %v532 = vcvt.s32.f32 %v530
        %v533 = vld [vmem:[%s2 + $0x300] sm:$0xff]
        %v534 = vld [vmem:[%s2 + $0x308] sm:$0xff]
        %v535 = vld [vmem:[%s2 + $0x310] sm:$0xff]
        %v536 = vld [vmem:[%s2 + $0x318] sm:$0xff]
        %v537 = vld [vmem:[%s2 + $0x320] sm:$0xff]
        %v538 = vld [vmem:[%s2 + $0x328] sm:$0xff]
        %v539 = vld [vmem:[%s2 + $0x330] sm:$0xff]
        %v540 = vld [vmem:[%s2 + $0x338] sm:$0xff]
        %v541 = vld [vmem:[%s2 + $0x340] sm:$0xff]
        %v542 = vld [vmem:[%s2 + $0x348] sm:$0xff]
        %v543 = vld [vmem:[%s2 + $0x350] sm:$0xff]
        %v544 = vld [vmem:[%s2 + $0x358] sm:$0xff]
        %v545 = vld [vmem:[%s2 + $0x360] sm:$0xff]
        %v546 = vld [vmem:[%s2 + $0x368] sm:$0xff]
        %v547 = vld [vmem:[%s2 + $0x370] sm:$0xff]
        %v548 = vld [vmem:[%s2 + $0x378] sm:$0xff]
        %v549 = vld [vmem:[%s2 + $0x380] sm:$0xff]
        %v550 = vld [vmem:[%s2 + $0x388] sm:$0xff]
        %v551 = vld [vmem:[%s2 + $0x390] sm:$0xff]
        %v552 = vld [vmem:[%s2 + $0x398] sm:$0xff]
        %v553 = vld [vmem:[%s2 + $0x3a0] sm:$0xff]
        %v554 = vld [vmem:[%s2 + $0x3a8] sm:$0xff]
        %v555 = vld [vmem:[%s2 + $0x3b0] sm:$0xff]
        %v556 = vld [vmem:[%s2 + $0x3b8] sm:$0xff]
        %v557 = vld [vmem:[%s2 + $0x3c0] sm:$0xff]
        %v558 = vld [vmem:[%s2 + $0x3c8] sm:$0xff]
        %v559 = vld [vmem:[%s2 + $0x3d0] sm:$0xff]
        %v560 = vld [vmem:[%s2 + $0x3d8] sm:$0xff]
        %v561 = vld [vmem:[%s2 + $0x3e0] sm:$0xff]
        %v562 = vld [vmem:[%s2 + $0x3e8] sm:$0xff]
        %v563 = vld [vmem:[%s2 + $0x3f0] sm:$0xff]
        %v564 = vld [vmem:[%s2 + $0x3f8] sm:$0xff]
        %565 = vmatprep.subr.mxu0 0.0
        %566 = vmatpush1.msra.mxu0 %v548
        %567 = vmatprep.subr.mxu0 0.0
        %568 = vmatpush1.msra.mxu0 %v547
        %569 = vmatprep.subr.mxu0 0.0
        %570 = vmatpush1.msra.mxu0 %v546
        %571 = vmatprep.subr.mxu0 0.0
        %572 = vmatpush1.msra.mxu0 %v545
        %573 = vmatprep.subr.mxu0 0.0
        %574 = vmatpush1.msra.mxu0 %v544
        %575 = vmatprep.subr.mxu0 0.0
        %576 = vmatpush1.msra.mxu0 %v543
        %577 = vmatprep.subr.mxu0 0.0
        %578 = vmatpush1.msra.mxu0 %v542
        %579 = vmatprep.subr.mxu0 0.0
        %580 = vmatpush1.msra.mxu0 %v541
        %581 = vmatprep.subr.mxu0 0.0
        %582 = vmatpush1.msra.mxu0 %v540
        %583 = vmatprep.subr.mxu0 0.0
        %584 = vmatpush1.msra.mxu0 %v539
        %585 = vmatprep.subr.mxu0 0.0
        %586 = vmatpush1.msra.mxu0 %v538
        %587 = vmatprep.subr.mxu0 0.0
        %588 = vmatpush1.msra.mxu0 %v537
        %589 = vmatprep.subr.mxu0 0.0
        %590 = vmatpush1.msra.mxu0 %v536
        %591 = vmatprep.subr.mxu0 0.0
        %592 = vmatpush1.msra.mxu0 %v535
        %593 = vmatprep.subr.mxu0 0.0
        %594 = vmatpush1.msra.mxu0 %v534
        %595 = vmatprep.subr.mxu0 0.0
        %596 = vmatpush1.msra.mxu0 %v533
        %597 = vmatprep.subr.mxu0 0.0
        %598 = vmatpush2.msra.mxu0 %v564
        %599 = vmatprep.subr.mxu0 0.0
        %600 = vmatpush2.msra.mxu0 %v563
        %601 = vmatprep.subr.mxu0 0.0
        %602 = vmatpush2.msra.mxu0 %v562
        %603 = vmatprep.subr.mxu0 0.0
        %604 = vmatpush2.msra.mxu0 %v561
        %605 = vmatprep.subr.mxu0 0.0
        %606 = vmatpush2.msra.mxu0 %v560
        %607 = vmatprep.subr.mxu0 0.0
        %608 = vmatpush2.msra.mxu0 %v559
        %609 = vmatprep.subr.mxu0 0.0
        %610 = vmatpush2.msra.mxu0 %v558
        %611 = vmatprep.subr.mxu0 0.0
        %612 = vmatpush2.msra.mxu0 %v557
        %613 = vmatprep.subr.mxu0 0.0
        %614 = vmatpush2.msra.mxu0 %v556
        %615 = vmatprep.subr.mxu0 0.0
        %616 = vmatpush2.msra.mxu0 %v555
        %617 = vmatprep.subr.mxu0 0.0
        %618 = vmatpush2.msra.mxu0 %v554
        %619 = vmatprep.subr.mxu0 0.0
        %620 = vmatpush2.msra.mxu0 %v553
        %621 = vmatprep.subr.mxu0 0.0
        %622 = vmatpush2.msra.mxu0 %v552
        %623 = vmatprep.subr.mxu0 0.0
        %624 = vmatpush2.msra.mxu0 %v551
        %625 = vmatprep.subr.mxu0 0.0
        %626 = vmatpush2.msra.mxu0 %v550
        %627 = vmatprep.subr.mxu0 0.0
        %628 = vmatpush2.msra.mxu0 %v549
        %629 = vmatprep.mubr.f32.mxu0 %v532
        %630 = vmatmul.mubr.f32.gmra.mxu0 %v531
        %v631 = vpop.f32.mrf.mxu0
        %v632 = vadd.f32 0.0, %v631
        %v633 = vpop.f32.mrf.mxu0
        %634 = vdwg.mxu0
        %v635 = vadd.f32 %v522, %v632
        %v636 = vadd.s32 %v186, 4294966272
        %637 = vset.pattern.permute.xlu0 0
        %638 = vperm.xlu0 %637, %v636
        %v639 = vpop.permute.xlu0 %638
        %vm640 = vcmp.eq.s32.totalorder %v184, %v639
        %vm641 = vcmp.eq.s32.totalorder %v185, %v639
        %v642 = vsel %vm640, 1, 0
        %v643 = vsel %vm641, 1, 0
        %v644 = vcvt.s32.f32 %v642
        %v645 = vcvt.s32.f32 %v643
        %v646 = vld [vmem:[%s2 + $0x400] sm:$0xff]
        %v647 = vld [vmem:[%s2 + $0x408] sm:$0xff]
        %v648 = vld [vmem:[%s2 + $0x410] sm:$0xff]
        %v649 = vld [vmem:[%s2 + $0x418] sm:$0xff]
        %v650 = vld [vmem:[%s2 + $0x420] sm:$0xff]
        %v651 = vld [vmem:[%s2 + $0x428] sm:$0xff]
        %v652 = vld [vmem:[%s2 + $0x430] sm:$0xff]
        %v653 = vld [vmem:[%s2 + $0x438] sm:$0xff]
        %v654 = vld [vmem:[%s2 + $0x440] sm:$0xff]
        %v655 = vld [vmem:[%s2 + $0x448] sm:$0xff]
        %v656 = vld [vmem:[%s2 + $0x450] sm:$0xff]
        %v657 = vld [vmem:[%s2 + $0x458] sm:$0xff]
        %v658 = vld [vmem:[%s2 + $0x460] sm:$0xff]
        %v659 = vld [vmem:[%s2 + $0x468] sm:$0xff]
        %v660 = vld [vmem:[%s2 + $0x470] sm:$0xff]
        %v661 = vld [vmem:[%s2 + $0x478] sm:$0xff]
        %v662 = vld [vmem:[%s2 + $0x480] sm:$0xff]
        %v663 = vld [vmem:[%s2 + $0x488] sm:$0xff]
        %v664 = vld [vmem:[%s2 + $0x490] sm:$0xff]
        %v665 = vld [vmem:[%s2 + $0x498] sm:$0xff]
        %v666 = vld [vmem:[%s2 + $0x4a0] sm:$0xff]
        %v667 = vld [vmem:[%s2 + $0x4a8] sm:$0xff]
        %v668 = vld [vmem:[%s2 + $0x4b0] sm:$0xff]
        %v669 = vld [vmem:[%s2 + $0x4b8] sm:$0xff]
        %v670 = vld [vmem:[%s2 + $0x4c0] sm:$0xff]
        %v671 = vld [vmem:[%s2 + $0x4c8] sm:$0xff]
        %v672 = vld [vmem:[%s2 + $0x4d0] sm:$0xff]
        %v673 = vld [vmem:[%s2 + $0x4d8] sm:$0xff]
        %v674 = vld [vmem:[%s2 + $0x4e0] sm:$0xff]
        %v675 = vld [vmem:[%s2 + $0x4e8] sm:$0xff]
        %v676 = vld [vmem:[%s2 + $0x4f0] sm:$0xff]
        %v677 = vld [vmem:[%s2 + $0x4f8] sm:$0xff]
        %678 = vmatprep.subr.mxu0 0.0
        %679 = vmatpush1.msra.mxu0 %v661
        %680 = vmatprep.subr.mxu0 0.0
        %681 = vmatpush1.msra.mxu0 %v660
        %682 = vmatprep.subr.mxu0 0.0
        %683 = vmatpush1.msra.mxu0 %v659
        %684 = vmatprep.subr.mxu0 0.0
        %685 = vmatpush1.msra.mxu0 %v658
        %686 = vmatprep.subr.mxu0 0.0
        %687 = vmatpush1.msra.mxu0 %v657
        %688 = vmatprep.subr.mxu0 0.0
        %689 = vmatpush1.msra.mxu0 %v656
        %690 = vmatprep.subr.mxu0 0.0
        %691 = vmatpush1.msra.mxu0 %v655
        %692 = vmatprep.subr.mxu0 0.0
        %693 = vmatpush1.msra.mxu0 %v654
        %694 = vmatprep.subr.mxu0 0.0
        %695 = vmatpush1.msra.mxu0 %v653
        %696 = vmatprep.subr.mxu0 0.0
        %697 = vmatpush1.msra.mxu0 %v652
        %698 = vmatprep.subr.mxu0 0.0
        %699 = vmatpush1.msra.mxu0 %v651
        %700 = vmatprep.subr.mxu0 0.0
        %701 = vmatpush1.msra.mxu0 %v650
        %702 = vmatprep.subr.mxu0 0.0
        %703 = vmatpush1.msra.mxu0 %v649
        %704 = vmatprep.subr.mxu0 0.0
        %705 = vmatpush1.msra.mxu0 %v648
        %706 = vmatprep.subr.mxu0 0.0
        %707 = vmatpush1.msra.mxu0 %v647
        %708 = vmatprep.subr.mxu0 0.0
        %709 = vmatpush1.msra.mxu0 %v646
        %710 = vmatprep.subr.mxu0 0.0
        %711 = vmatpush2.msra.mxu0 %v677
        %712 = vmatprep.subr.mxu0 0.0
        %713 = vmatpush2.msra.mxu0 %v676
        %714 = vmatprep.subr.mxu0 0.0
        %715 = vmatpush2.msra.mxu0 %v675
        %716 = vmatprep.subr.mxu0 0.0
        %717 = vmatpush2.msra.mxu0 %v674
        %718 = vmatprep.subr.mxu0 0.0
        %719 = vmatpush2.msra.mxu0 %v673
        %720 = vmatprep.subr.mxu0 0.0
        %721 = vmatpush2.msra.mxu0 %v672
        %722 = vmatprep.subr.mxu0 0.0
        %723 = vmatpush2.msra.mxu0 %v671
        %724 = vmatprep.subr.mxu0 0.0
        %725 = vmatpush2.msra.mxu0 %v670
        %726 = vmatprep.subr.mxu0 0.0
        %727 = vmatpush2.msra.mxu0 %v669
        %728 = vmatprep.subr.mxu0 0.0
        %729 = vmatpush2.msra.mxu0 %v668
        %730 = vmatprep.subr.mxu0 0.0
        %731 = vmatpush2.msra.mxu0 %v667
        %732 = vmatprep.subr.mxu0 0.0
        %733 = vmatpush2.msra.mxu0 %v666
        %734 = vmatprep.subr.mxu0 0.0
        %735 = vmatpush2.msra.mxu0 %v665
        %736 = vmatprep.subr.mxu0 0.0
        %737 = vmatpush2.msra.mxu0 %v664
        %738 = vmatprep.subr.mxu0 0.0
        %739 = vmatpush2.msra.mxu0 %v663
        %740 = vmatprep.subr.mxu0 0.0
        %741 = vmatpush2.msra.mxu0 %v662
        %742 = vmatprep.mubr.f32.mxu0 %v645
        %743 = vmatmul.mubr.f32.gmra.mxu0 %v644
        %v744 = vpop.f32.mrf.mxu0
        %v745 = vadd.f32 0.0, %v744
        %v746 = vpop.f32.mrf.mxu0
        %747 = vdwg.mxu0
        %v748 = vadd.f32 %v635, %v745
        %v749 = vadd.s32 %v186, 4294966016
        %750 = vset.pattern.permute.xlu0 0
        %751 = vperm.xlu0 %750, %v749
        %v752 = vpop.permute.xlu0 %751
        %vm753 = vcmp.eq.s32.totalorder %v184, %v752
        %vm754 = vcmp.eq.s32.totalorder %v185, %v752
        %v755 = vadd.s32 %v186, 160
        %756 = vset.pattern.permute.xlu0 1
        %757 = vperm.xlu0 %756, %v755
        %v758 = vpop.permute.xlu0 %757
        %vm759 = vcmp.eq.s32.totalorder %v184, %v758
        %vm760 = vcmp.eq.s32.totalorder %v185, %v758
        %vm761 = vmor %vm753, %vm759
        %vm762 = vmor %vm754, %vm760
        %v763 = vsel %vm761, 1, 0
        %v764 = vsel %vm762, 1, 0
        %v765 = vcvt.s32.f32 %v763
        %v766 = vcvt.s32.f32 %v764
        %v767 = vld [vmem:[%s2 + $0x500] sm:$0xff]
        %v768 = vld [vmem:[%s2 + $0x508] sm:$0xff]
        %v769 = vld [vmem:[%s2 + $0x510] sm:$0xff]
        %v770 = vld [vmem:[%s2 + $0x518] sm:$0xff]
        %v771 = vld [vmem:[%s2 + $0x520] sm:$0xff]
        %v772 = vld [vmem:[%s2 + $0x528] sm:$0xff]
        %v773 = vld [vmem:[%s2 + $0x530] sm:$0xff]
        %v774 = vld [vmem:[%s2 + $0x538] sm:$0xff]
        %v775 = vld [vmem:[%s2 + $0x540] sm:$0xff]
        %v776 = vld [vmem:[%s2 + $0x548] sm:$0xff]
        %v777 = vld [vmem:[%s2 + $0x550] sm:$0xff]
        %v778 = vld [vmem:[%s2 + $0x558] sm:$0xff]
        %v779 = vld [vmem:[%s2 + $0x560] sm:$0xff]
        %v780 = vld [vmem:[%s2 + $0x568] sm:$0xff]
        %v781 = vld [vmem:[%s2 + $0x570] sm:$0xff]
        %v782 = vld [vmem:[%s2 + $0x578] sm:$0xff]
        %v783 = vld [vmem:[%s2 + $0x580] sm:$0xff]
        %v784 = vld [vmem:[%s2 + $0x588] sm:$0xff]
        %v785 = vld [vmem:[%s2 + $0x590] sm:$0xff]
        %v786 = vld [vmem:[%s2 + $0x598] sm:$0xff]
        %v787 = vld [vmem:[%s2 + $0x5a0] sm:$0xff]
        %v788 = vld [vmem:[%s2 + $0x5a8] sm:$0xff]
        %v789 = vld [vmem:[%s2 + $0x5b0] sm:$0xff]
        %v790 = vld [vmem:[%s2 + $0x5b8] sm:$0xff]
        %v791 = vld [vmem:[%s2 + $0x5c0] sm:$0xff]
        %v792 = vld [vmem:[%s2 + $0x5c8] sm:$0xff]
        %v793 = vld [vmem:[%s2 + $0x5d0] sm:$0xff]
        %v794 = vld [vmem:[%s2 + $0x5d8] sm:$0xff]
        %v795 = vld [vmem:[%s2 + $0x5e0] sm:$0xff]
        %v796 = vld [vmem:[%s2 + $0x5e8] sm:$0xff]
        %v797 = vld [vmem:[%s2 + $0x5f0] sm:$0xff]
        %v798 = vld [vmem:[%s2 + $0x5f8] sm:$0xff]
        %799 = vmatprep.subr.mxu0 0.0
        %800 = vmatpush1.msra.mxu0 %v782
        %801 = vmatprep.subr.mxu0 0.0
        %802 = vmatpush1.msra.mxu0 %v781
        %803 = vmatprep.subr.mxu0 0.0
        %804 = vmatpush1.msra.mxu0 %v780
        %805 = vmatprep.subr.mxu0 0.0
        %806 = vmatpush1.msra.mxu0 %v779
        %807 = vmatprep.subr.mxu0 0.0
        %808 = vmatpush1.msra.mxu0 %v778
        %809 = vmatprep.subr.mxu0 0.0
        %810 = vmatpush1.msra.mxu0 %v777
        %811 = vmatprep.subr.mxu0 0.0
        %812 = vmatpush1.msra.mxu0 %v776
        %813 = vmatprep.subr.mxu0 0.0
        %814 = vmatpush1.msra.mxu0 %v775
        %815 = vmatprep.subr.mxu0 0.0
        %816 = vmatpush1.msra.mxu0 %v774
        %817 = vmatprep.subr.mxu0 0.0
        %818 = vmatpush1.msra.mxu0 %v773
        %819 = vmatprep.subr.mxu0 0.0
        %820 = vmatpush1.msra.mxu0 %v772
        %821 = vmatprep.subr.mxu0 0.0
        %822 = vmatpush1.msra.mxu0 %v771
        %823 = vmatprep.subr.mxu0 0.0
        %824 = vmatpush1.msra.mxu0 %v770
        %825 = vmatprep.subr.mxu0 0.0
        %826 = vmatpush1.msra.mxu0 %v769
        %827 = vmatprep.subr.mxu0 0.0
        %828 = vmatpush1.msra.mxu0 %v768
        %829 = vmatprep.subr.mxu0 0.0
        %830 = vmatpush1.msra.mxu0 %v767
        %831 = vmatprep.subr.mxu0 0.0
        %832 = vmatpush2.msra.mxu0 %v798
        %833 = vmatprep.subr.mxu0 0.0
        %834 = vmatpush2.msra.mxu0 %v797
        %835 = vmatprep.subr.mxu0 0.0
        %836 = vmatpush2.msra.mxu0 %v796
        %837 = vmatprep.subr.mxu0 0.0
        %838 = vmatpush2.msra.mxu0 %v795
        %839 = vmatprep.subr.mxu0 0.0
        %840 = vmatpush2.msra.mxu0 %v794
        %841 = vmatprep.subr.mxu0 0.0
        %842 = vmatpush2.msra.mxu0 %v793
        %843 = vmatprep.subr.mxu0 0.0
        %844 = vmatpush2.msra.mxu0 %v792
        %845 = vmatprep.subr.mxu0 0.0
        %846 = vmatpush2.msra.mxu0 %v791
        %847 = vmatprep.subr.mxu0 0.0
        %848 = vmatpush2.msra.mxu0 %v790
        %849 = vmatprep.subr.mxu0 0.0
        %850 = vmatpush2.msra.mxu0 %v789
        %851 = vmatprep.subr.mxu0 0.0
        %852 = vmatpush2.msra.mxu0 %v788
        %853 = vmatprep.subr.mxu0 0.0
        %854 = vmatpush2.msra.mxu0 %v787
        %855 = vmatprep.subr.mxu0 0.0
        %856 = vmatpush2.msra.mxu0 %v786
        %857 = vmatprep.subr.mxu0 0.0
        %858 = vmatpush2.msra.mxu0 %v785
        %859 = vmatprep.subr.mxu0 0.0
        %860 = vmatpush2.msra.mxu0 %v784
        %861 = vmatprep.subr.mxu0 0.0
        %862 = vmatpush2.msra.mxu0 %v783
        %863 = vmatprep.mubr.f32.mxu0 %v766
        %864 = vmatmul.mubr.f32.gmra.mxu0 %v765
        %v865 = vpop.f32.mrf.mxu0
        %v866 = vadd.f32 0.0, %v865
        %v867 = vpop.f32.mrf.mxu0
        %868 = vdwg.mxu0
        %v869 = vadd.f32 %v748, %v866
        %vm870 = vcmask 105472
        %871 = vst.msk [vmem:[%s174] sm:$0xff] %vm870, %v869
        %v872 = vld [vmem:[%s182] sm:$0xff]
        %874 = vrot.lane.b32.xlu0 %v872, 12
        %v875 = vpop.permute.xlu0 %874
        %vm877 = vcmask 105568
        %878 = vst.msk [vmem:[%s174] sm:$0xff] %vm877, %v875
        %s879 = sand.u32 %s98, 1
        %s880 = scalar_lea.sflag [#allocation3], %s879
        %s881 = sand.u32 %s98, 1
        %s882 = smul.addr %s881, 8
        %s883 = scalar_lea.vmem [#allocation2], %s882
        // Predicated region
        $region33: #{tpu_custom_call.1} parent=31 // pred_check
          %p884 = pneg %p108
        $region34: #{tpu_custom_call.1} parent=31 // pred_check_branch
          %886 = sbr.rel (%p884) target = $region36
        $region35: #{tpu_custom_call.1} parent=31 // pred_region
          %s888 = ssub.s32 128, 128
          %889 = vsyncadd %s880, %s888
          %s890 = smul.addr %s17, 128
          %s891 = scalar_lea.hbm %s3, %s890
          %s893 = sshll.u32 %s883, 4
          %s894 = int_to_ptr.vmem [resolvable:$true] %s893
          %896 = dma.vmem_to_hbm [thread:$0]  %s894, 128, %s891, %s880
        $region36: #{tpu_custom_call.1} parent=31 // pred_fallthru
          _
      $region32: #{tpu_custom_call.1} parent=5 // pred_fallthru
        _
      %p897 = scmp.le.s32.totalorder 2, %s12
      // Predicated region
      $region37: #{tpu_custom_call.1} parent=5 // pred_check
        %p898 = pneg %p897
      $region38: #{tpu_custom_call.1} parent=5 // pred_check_branch
        %900 = sbr.rel (%p898) target = $region40
      $region39: #{tpu_custom_call.1} parent=5 // pred_region
        %s901 = ssub.s32 %s12, 2
        // Predicated region
        $region41: #{tpu_custom_call.1} parent=39 // pred_check
          %p902 = pneg %p114
        $region42: #{tpu_custom_call.1} parent=39 // pred_check_branch
          %904 = sbr.rel (%p902) target = $region44
        $region43: #{tpu_custom_call.1} parent=39 // pred_region
          %s905 = sand.u32 %s99, 1
          %s906 = scalar_lea.sflag [#allocation3], %s905
          %s907 = sand.u32 %s99, 1
          %s908 = smul.addr %s907, 8
          %s909 = scalar_lea.vmem [#allocation2], %s908
          %910 = dma.done %s906, 128
        $region44: #{tpu_custom_call.1} parent=39 // pred_fallthru
          _
      $region40: #{tpu_custom_call.1} parent=5 // pred_fallthru
        _
    $region6: #{tpu_custom_call.1} parent=1 // loop_footer
      %s16 = sadd.s32 1, %s12
    $region7: #{tpu_custom_call.1} parent=1 // loop_footer_branch
      %11 = sbr.rel target = $region3
    $region8: #{tpu_custom_call.1} parent=1 // loop_exit
      _
    %911 = vsyncpa [#allocation3], 1
    %s912 = scalar_lea.sflag [#allocation3], 1
    %913 = vsyncpa %s912, 1

</llo_original>
